<compile_context>
chip_gen: v5e
topology: v5e:2x2
jax: 0.10.0
libtpu: 0.0.40
codegen_flags: <defaults>
</compile_context>

<pallas_src>
import functools

import jax
import jax.numpy as jnp
from jax.experimental import pallas as pl
from jax.experimental.pallas import tpu as pltpu

ALPHA = 0.25
GAMMA = 2.0
LANES = 128
MAX_ROW_TILE = 1024   # (1024,128) f32 tile = 512 KiB; x2 inputs x2 buffers = 2 MiB VMEM
NUM_SHARDS = 2        # leading "parallel" grid axis -> uses both TensorCores on v7x


def _round_up(x, m):
    return (x + m - 1) // m * m


def _focal_bce_kernel(p_ref, t_ref, o_ref, acc_ref, *,
                      rows, row_tile, steps_per_shard, binary_targets):
    shard = pl.program_id(0)
    step = pl.program_id(1)

    @pl.when(step == 0)
    def _():
        acc_ref[...] = jnp.zeros_like(acc_ref)

    p = p_ref[...].astype(jnp.float32)
    t = t_ref[...].astype(jnp.float32)

    if binary_targets:
        # Optional fast path (one EUP log instead of two). Only valid for
        # strictly {0,1} targets; default path below matches PyTorch exactly.
        p_eff = jnp.where(t > 0.5, p, 1.0 - p)
        bce_elem = -jnp.maximum(jnp.log(p_eff), -100.0)
    else:
        # Exact F.binary_cross_entropy element-wise form (log clamped at -100).
        log_p = jnp.maximum(jnp.log(p), -100.0)
        log_1mp = jnp.maximum(jnp.log(1.0 - p), -100.0)
        bce_elem = -(t * log_p + (1.0 - t) * log_1mp)

    # Mask rows beyond the logical extent (tail tile / over-provisioned shard).
    tile_row0 = (shard * steps_per_shard + step) * row_tile
    row_idx = tile_row0 + jax.lax.broadcasted_iota(jnp.int32, (row_tile, LANES), 0)
    bce_elem = jnp.where(row_idx < rows, bce_elem, 0.0)

    # VPU-only accumulation into one (8,128) vreg; cross-lane reduce deferred.
    acc_ref[...] += jnp.sum(bce_elem.reshape(row_tile // 8, 8, LANES), axis=0)

    @pl.when(step == pl.num_programs(1) - 1)
    def _():
        o_ref[...] = acc_ref[...].reshape(1, 8, LANES)


def focal_loss(inputs, targets, alpha=ALPHA, gamma=GAMMA, binary_targets=False):
    """inputs: probabilities in (0,1); targets: same shape. Returns scalar f32."""
    n = inputs.size
    p = inputs.reshape(-1)
    t = targets.reshape(-1)
    if t.dtype == jnp.bool_:
        t = t.astype(jnp.int8)

    # Pad (only when needed) to a multiple of LANES so we can view as (rows,128).
    # Padded probability=1 / target=1 contributes exactly 0 BCE. For the common
    # case (numel % 128 == 0, e.g. NCHW with H*W a multiple of 128) this is a
    # zero-copy reshape.
    n_pad = _round_up(n, LANES)
    if n_pad != n:
        p = jnp.pad(p, (0, n_pad - n), constant_values=1)
        t = jnp.pad(t, (0, n_pad - n), constant_values=1)

    rows = n_pad // LANES
    p2 = p.reshape(rows, LANES)
    t2 = t.reshape(rows, LANES)

    # Sublane multiple required by the narrower streamed dtype (f32:8, bf16:16, i8:32).
    sub = max(
        max(8, 32 // jnp.dtype(p2.dtype).itemsize),
        max(8, 32 // jnp.dtype(t2.dtype).itemsize),
    )
    row_tile = min(MAX_ROW_TILE, _round_up(rows, sub))
    total_steps = pl.cdiv(rows, row_tile)
    steps_per_shard = pl.cdiv(total_steps, NUM_SHARDS)
    last_block = total_steps - 1

    def in_map(c, k):
        # Clamp so an over-provisioned shard re-reads the last block; the
        # in-kernel row mask zeroes its contribution.
        return (jnp.minimum(c * steps_per_shard + k, last_block), 0)

    kernel = functools.partial(
        _focal_bce_kernel,
        rows=rows,
        row_tile=row_tile,
        steps_per_shard=steps_per_shard,
        binary_targets=binary_targets,
    )

    partials = pl.pallas_call(
        kernel,
        out_shape=jax.ShapeDtypeStruct((NUM_SHARDS, 8, LANES), jnp.float32),
        grid_spec=pltpu.PrefetchScalarGridSpec(
            num_scalar_prefetch=0,
            grid=(NUM_SHARDS, steps_per_shard),
            in_specs=[
                pl.BlockSpec((row_tile, LANES), in_map),
                pl.BlockSpec((row_tile, LANES), in_map),
            ],
            out_specs=pl.BlockSpec((1, 8, LANES), lambda c, k: (c, 0, 0)),
            scratch_shapes=[pltpu.VMEM((8, LANES), jnp.float32)],
        ),
        compiler_params=pltpu.CompilerParams(
            dimension_semantics=("parallel", "arbitrary"),
        ),
    )(p2, t2)

    # Tiny epilogue (2*8*128 partial sums + a handful of scalar ops) in plain JAX.
    bce = jnp.sum(partials) / jnp.float32(n)
    bce_exp = jnp.exp(-bce)
    one_m = 1.0 - bce_exp
    modulator = one_m * one_m if gamma == 2.0 else one_m ** gamma
    return (alpha * modulator * bce).astype(jnp.float32)


def focal_loss_ref(inputs, targets, alpha=ALPHA, gamma=GAMMA):
    p = inputs.reshape(-1).astype(jnp.float32)
    t = targets.reshape(-1).astype(jnp.float32)
    log_p = jnp.maximum(jnp.log(p), -100.0)
    log_1mp = jnp.maximum(jnp.log(1.0 - p), -100.0)
    bce = jnp.mean(-(t * log_p + (1.0 - t) * log_1mp))
    return alpha * (1.0 - jnp.exp(-bce)) ** gamma * bce


if __name__ == "__main__":
    key = jax.random.PRNGKey(0)
    k1, k2 = jax.random.split(key)

    # Small NCHW shapes: batch=2, channels=4, spatial=16x16
    x_shape = (2, 4, 16, 16)
    inputs = jax.nn.sigmoid(jax.random.normal(k1, x_shape, jnp.float32))
    targets = (jax.random.uniform(k2, x_shape) > 0.5).astype(jnp.float32)

    out = jax.block_until_ready(focal_loss(inputs, targets))
    ref = focal_loss_ref(inputs, targets)
    assert jnp.allclose(out, ref, rtol=1e-5, atol=1e-6), (out, ref)
    print("KERNEL_OK")
</pallas_src>

<mosaic_0001>
module attributes {stable_mosaic.version = 11 : i64} {
  func.func @_focal_bce_kernel(%arg0: i32, %arg1: i32, %arg2: memref<16x128xf32, #tpu.memory_space<vmem>>, %arg3: memref<16x128xf32, #tpu.memory_space<vmem>>, %arg4: memref<1x8x128xf32, #tpu.memory_space<vmem>>, %arg5: memref<8x128xf32, #tpu.memory_space<vmem>>) attributes {dimension_semantics = [#tpu.dimension_semantics<parallel>, #tpu.dimension_semantics<arbitrary>], iteration_bounds = array<i64: 2, 1>, scalar_prefetch = 0 : i64, scratch_operands = 1 : i64, tpu.core_type = #tpu.core_type<tc>, window_params = [{transform_indices = @transform_0, window_bounds = array<i64: 16, 128>}, {transform_indices = @transform_1, window_bounds = array<i64: 16, 128>}, {transform_indices = @transform_2, window_bounds = array<i64: 1, 8, 128>}]} {
    %c0_i32 = arith.constant 0 : i32
    %0 = arith.cmpi eq, %arg1, %c0_i32 : i32
    %1 = arith.extui %0 : i1 to i32
    %c0_i32_0 = arith.constant 0 : i32
    %2 = arith.cmpi ne, %1, %c0_i32_0 : i32
    scf.if %2 {
      %cst_17 = arith.constant 0.000000e+00 : f32
      %38 = vector.broadcast %cst_17 : f32 to vector<8x128xf32>
      %c0_18 = arith.constant 0 : index
      %c0_19 = arith.constant 0 : index
      %39 = vector.load %arg5[%c0_18, %c0_19] : memref<8x128xf32, #tpu.memory_space<vmem>>, vector<8x128xf32>
      tpu.vector_store %arg5[%c0_18, %c0_19], %38 {strides = array<i32>} : memref<8x128xf32, #tpu.memory_space<vmem>>, vector<8x128xf32>,
    } else {
    }
    %c0 = arith.constant 0 : index
    %c0_1 = arith.constant 0 : index
    %3 = vector.load %arg2[%c0, %c0_1] : memref<16x128xf32, #tpu.memory_space<vmem>>, vector<16x128xf32>
    %c0_2 = arith.constant 0 : index
    %c0_3 = arith.constant 0 : index
    %4 = vector.load %arg3[%c0_2, %c0_3] : memref<16x128xf32, #tpu.memory_space<vmem>>, vector<16x128xf32>
    %5 = math.log %3 : vector<16x128xf32>
    %cst = arith.constant -1.000000e+02 : f32
    %6 = vector.broadcast %cst : f32 to vector<16x128xf32>
    %7 = arith.maximumf %5, %6 : vector<16x128xf32>
    %cst_4 = arith.constant 1.000000e+00 : f32
    %8 = vector.broadcast %cst_4 : f32 to vector<16x128xf32>
    %9 = arith.subf %8, %3 : vector<16x128xf32>
    %10 = math.log %9 : vector<16x128xf32>
    %cst_5 = arith.constant -1.000000e+02 : f32
    %11 = vector.broadcast %cst_5 : f32 to vector<16x128xf32>
    %12 = arith.maximumf %10, %11 : vector<16x128xf32>
    %13 = arith.mulf %4, %7 : vector<16x128xf32>
    %cst_6 = arith.constant 1.000000e+00 : f32
    %14 = vector.broadcast %cst_6 : f32 to vector<16x128xf32>
    %15 = arith.subf %14, %4 : vector<16x128xf32>
    %16 = arith.mulf %15, %12 : vector<16x128xf32>
    %17 = arith.addf %13, %16 : vector<16x128xf32>
    %cst_7 = arith.constant 0.000000e+00 : f32
    %18 = vector.broadcast %cst_7 : f32 to vector<16x128xf32>
    %19 = arith.subf %18, %17 : vector<16x128xf32>
    %c1_i32 = arith.constant 1 : i32
    %20 = arith.muli %arg0, %c1_i32 : i32
    %21 = arith.addi %20, %arg1 : i32
    %c16_i32 = arith.constant 16 : i32
    %22 = arith.muli %21, %c16_i32 : i32
    %23 = tpu.iota {dimensions = array<i32: 0>} : vector<16x128xi32>
    %24 = vector.broadcast %22 : i32 to vector<16x128xi32>
    %25 = arith.addi %24, %23 : vector<16x128xi32>
    %c16_i32_8 = arith.constant 16 : i32
    %26 = vector.broadcast %c16_i32_8 : i32 to vector<16x128xi32>
    %27 = arith.cmpi slt, %25, %26 : vector<16x128xi32>
    %cst_9 = arith.constant 0.000000e+00 : f32
    %28 = vector.broadcast %cst_9 : f32 to vector<16x128xf32>
    %29 = arith.select %27, %19, %28 : vector<16x128xi1>, vector<16x128xf32>
    %c0_10 = arith.constant 0 : index
    %c0_11 = arith.constant 0 : index
    %30 = vector.load %arg5[%c0_10, %c0_11] : memref<8x128xf32, #tpu.memory_space<vmem>>, vector<8x128xf32>
    %31 = vector.shape_cast %29 : vector<16x128xf32> to vector<2x8x128xf32>
    %cst_12 = arith.constant dense<0.000000e+00> : vector<8x128xf32>
    %32 = vector.multi_reduction <add>, %31, %cst_12 [0] : vector<2x8x128xf32> to vector<8x128xf32>
    %33 = arith.addf %30, %32 : vector<8x128xf32>
    %c0_13 = arith.constant 0 : index
    %c0_14 = arith.constant 0 : index
    %34 = vector.load %arg5[%c0_13, %c0_14] : memref<8x128xf32, #tpu.memory_space<vmem>>, vector<8x128xf32>
    tpu.vector_store %arg5[%c0_13, %c0_14], %33 {strides = array<i32>} : memref<8x128xf32, #tpu.memory_space<vmem>>, vector<8x128xf32>,
    %c0_i32_15 = arith.constant 0 : i32
    %35 = arith.cmpi eq, %arg1, %c0_i32_15 : i32
    %36 = arith.extui %35 : i1 to i32
    %c0_i32_16 = arith.constant 0 : i32
    %37 = arith.cmpi ne, %36, %c0_i32_16 : i32
    scf.if %37 {
      %c0_17 = arith.constant 0 : index
      %c0_18 = arith.constant 0 : index
      %38 = vector.load %arg5[%c0_17, %c0_18] : memref<8x128xf32, #tpu.memory_space<vmem>>, vector<8x128xf32>
      %39 = vector.shape_cast %38 : vector<8x128xf32> to vector<1x8x128xf32>
      %c0_19 = arith.constant 0 : index
      %c0_20 = arith.constant 0 : index
      %c0_21 = arith.constant 0 : index
      %40 = vector.load %arg4[%c0_19, %c0_20, %c0_21] : memref<1x8x128xf32, #tpu.memory_space<vmem>>, vector<1x8x128xf32>
      tpu.vector_store %arg4[%c0_19, %c0_20, %c0_21], %39 {strides = array<i32>} : memref<1x8x128xf32, #tpu.memory_space<vmem>>, vector<1x8x128xf32>,
    } else {
    }
    return
  }
  func.func @transform_0(%arg0: i32, %arg1: i32) -> (i32, i32) {
    %c1_i32 = arith.constant 1 : i32
    %0 = arith.muli %arg0, %c1_i32 : i32
    %1 = arith.addi %0, %arg1 : i32
    %c0_i32 = arith.constant 0 : i32
    %2 = arith.minsi %1, %c0_i32 : i32
    %c0_i32_0 = arith.constant 0 : i32
    %c0_i32_1 = arith.constant 0 : i32
    return %2, %c0_i32_0 : i32, i32
  }
  func.func @transform_1(%arg0: i32, %arg1: i32) -> (i32, i32) {
    %c1_i32 = arith.constant 1 : i32
    %0 = arith.muli %arg0, %c1_i32 : i32
    %1 = arith.addi %0, %arg1 : i32
    %c0_i32 = arith.constant 0 : i32
    %2 = arith.minsi %1, %c0_i32 : i32
    %c0_i32_0 = arith.constant 0 : i32
    %c0_i32_1 = arith.constant 0 : i32
    return %2, %c0_i32_0 : i32, i32
  }
  func.func @transform_2(%arg0: i32, %arg1: i32) -> (i32, i32, i32) {
    %c0_i32 = arith.constant 0 : i32
    %c0_i32_0 = arith.constant 0 : i32
    %c0_i32_1 = arith.constant 0 : i32
    return %arg0, %c0_i32, %c0_i32_0 : i32, i32, i32
  }
}

</mosaic_0001>

<llo_original>
// kernel: tpu_custom_call.1
$region0: #{tpu_custom_call.1}
  #allocation0 [shape = 'u32[]', space=smem, size = 0x4, offset = 0x4, fixed_abs, tag = 'smem constant byte address 0x4 - core index']
  #allocation1 [shape = 'u32[72,128]{1,0:T(1,128)}', space=vmem, size = 0x9000, scoped, tag = 'internal scratch']
  #allocation2 [shape = 'f32[8,128]{1,0:T(8,128)}', space=vmem, size = 0x1000, scoped, tag = 'scratch operand']
  %s0 = inlined_call_operand.hbm [shape: f32[16,128], index: 0, kind: input, shape index: {}]
  %s1 = inlined_call_operand.hbm [shape: f32[16,128], index: 1, kind: input, shape index: {}]
  %s2 = inlined_call_operand.hbm [shape: f32[2,8,128], index: 2, kind: output, shape index: {}]
  %s3 = sld [smem:[#allocation0]]
  $region57: #{tpu_custom_call.1} parent=0
    _
  %s5 = ssub.s32 1, %s3
  %s6 = scalar_select 0, %s5, %s3
  $region1: #{tpu_custom_call.1} parent=0
    #allocation3 [shape = 'u8[16384]{0}', space=vmem, size = 0x4000, scoped, tag = 'input window, operand 0']
    #allocation4 [shape = 's32[2]{0}', space=sflag, size = 0x8, scoped, tag = 'scoped memory for tpu_custom_call.1']
    #allocation5 [shape = 's32[2]{0}', space=sflag, size = 0x8, scoped, tag = 'scoped memory for tpu_custom_call.1']
    #allocation6 [shape = 'u8[16384]{0}', space=vmem, size = 0x4000, scoped, tag = 'input window, operand 1']
    #allocation7 [shape = 's32[2]{0}', space=sflag, size = 0x8, scoped, tag = 'scoped memory for tpu_custom_call.1']
    #allocation8 [shape = 'u8[8192]{0}', space=vmem, size = 0x2000, scoped, tag = 'output window, operand 0']
    %7 = vsyncpa [#allocation4], 0
    %s8 = scalar_lea.sflag [#allocation4], 1
    %9 = vsyncpa %s8, 0
    %10 = vsyncpa [#allocation7], 0
    %s11 = scalar_lea.sflag [#allocation7], 1
    %12 = vsyncpa %s11, 0
    %13 = vsyncpa [#allocation5], 0
    %s14 = scalar_lea.sflag [#allocation5], 1
    %15 = vsyncpa %s14, 0
    loop: start=0, step=1, limit=4
    $region2: #{tpu_custom_call.1} parent=1 // loop_pre_header
      _
    $region3: #{tpu_custom_call.1} parent=1 // loop_header
      %s17 = sphi 0, %s21
      %p18 = scmp.ge.s32.totalorder %s17, 4
      %s24 = sphi 0, %s36
      %s25 = sphi 0, %s32
      %s26 = sphi 0, %s24
      %s27 = sphi 0, %s25
      %s28 = sphi 0, %s26
      %s29 = sphi 0, %s27
      %s45 = sphi 0, %s47
      %s48 = sphi 0, %s45
      %s49 = sphi 0, %s48
      %s65 = sphi 0, %s49
      %s77 = sphi 0, %s79
      %s80 = sphi 0, %s77
      %s81 = sphi 0, %s80
      %s97 = sphi 0, %s81
      %s103 = sphi 0, %s105
      %s106 = sphi 0, %s103
      %s107 = sphi 0, %s106
      %s123 = sphi 0, %s107
    $region4: #{tpu_custom_call.1} parent=1 // loop_header_branch
      %20 = sbr.rel (%p18) target = $region8
    $region5: #{tpu_custom_call.1} parent=1 // loop_body
      %s22 = ssub.s32 %s17, 1
      %s23 = ssub.s32 %s17, 2
      %s30 = sadd.s32 1, %s25
      %p31 = scmp.ge.s32.totalorder %s30, 1
      %s32 = scalar_select %p31, 0, %s30
      %s33 = sadd.s32 1, %s24
      %s34 = scalar_select %p31, %s33, %s24
      %p35 = scmp.ge.s32.totalorder %s34, 2
      %s36 = scalar_select %p35, 0, %s34
      %s37 = sadd.s32 %s24, %s25
      %p38 = scmp.lt.s32.totalorder %s37, 0
      %s39 = scalar_select %p38, %s37, 0
      %s40 = sadd.s32 %s36, %s32
      %p41 = scmp.lt.s32.totalorder %s40, 0
      %s42 = scalar_select %p41, %s40, 0
      %s43 = ssub.s32 %s39, %s42
      %p44 = scmp.eq.s32.totalorder %s43, 0
      %s46 = sadd.s32 %s45, 1
      %s47 = scalar_select %p44, %s45, %s46
      %p50 = pneg %p44
      %p51 = scmp.eq.s32.totalorder %s17, 1
      %p52 = por %p50, %p51
      %p53 = scmp.ne.s32.totalorder %s45, %s48
      %p54 = scmp.eq.s32.totalorder %s17, 0
      %p55 = por %p53, %p54
      %p56 = scmp.ne.s32.totalorder %s45, %s48
      %p57 = scmp.eq.s32.totalorder %s22, 1
      %p58 = por %p56, %p57
      %p59 = scmp.ne.s32.totalorder %s48, %s49
      %p60 = scmp.eq.s32.totalorder %s22, 0
      %p61 = por %p59, %p60
      %p62 = scmp.ne.s32.totalorder %s48, %s49
      %p63 = scmp.eq.s32.totalorder %s23, 1
      %p64 = por %p62, %p63
      %p66 = scmp.ne.s32.totalorder %s49, %s65
      %p67 = scmp.eq.s32.totalorder %s23, 0
      %p68 = por %p66, %p67
      %s69 = sadd.s32 %s24, %s25
      %p70 = scmp.lt.s32.totalorder %s69, 0
      %s71 = scalar_select %p70, %s69, 0
      %s72 = sadd.s32 %s36, %s32
      %p73 = scmp.lt.s32.totalorder %s72, 0
      %s74 = scalar_select %p73, %s72, 0
      %s75 = ssub.s32 %s71, %s74
      %p76 = scmp.eq.s32.totalorder %s75, 0
      %s78 = sadd.s32 %s77, 1
      %s79 = scalar_select %p76, %s77, %s78
      %p82 = pneg %p76
      %p83 = scmp.eq.s32.totalorder %s17, 1
      %p84 = por %p82, %p83
      %p85 = scmp.ne.s32.totalorder %s77, %s80
      %p86 = scmp.eq.s32.totalorder %s17, 0
      %p87 = por %p85, %p86
      %p88 = scmp.ne.s32.totalorder %s77, %s80
      %p89 = scmp.eq.s32.totalorder %s22, 1
      %p90 = por %p88, %p89
      %p91 = scmp.ne.s32.totalorder %s80, %s81
      %p92 = scmp.eq.s32.totalorder %s22, 0
      %p93 = por %p91, %p92
      %p94 = scmp.ne.s32.totalorder %s80, %s81
      %p95 = scmp.eq.s32.totalorder %s23, 1
      %p96 = por %p94, %p95
      %p98 = scmp.ne.s32.totalorder %s81, %s97
      %p99 = scmp.eq.s32.totalorder %s23, 0
      %p100 = por %p98, %p99
      %s101 = ssub.s32 %s24, %s36
      %p102 = scmp.eq.s32.totalorder %s101, 0
      %s104 = sadd.s32 %s103, 1
      %s105 = scalar_select %p102, %s103, %s104
      %p108 = pneg %p102
      %p109 = scmp.eq.s32.totalorder %s17, 1
      %p110 = por %p108, %p109
      %p111 = scmp.ne.s32.totalorder %s103, %s106
      %p112 = scmp.eq.s32.totalorder %s17, 0
      %p113 = por %p111, %p112
      %p114 = scmp.ne.s32.totalorder %s103, %s106
      %p115 = scmp.eq.s32.totalorder %s22, 1
      %p116 = por %p114, %p115
      %p117 = scmp.ne.s32.totalorder %s106, %s107
      %p118 = scmp.eq.s32.totalorder %s22, 0
      %p119 = por %p117, %p118
      %p120 = scmp.ne.s32.totalorder %s106, %s107
      %p121 = scmp.eq.s32.totalorder %s23, 1
      %p122 = por %p120, %p121
      %p124 = scmp.ne.s32.totalorder %s107, %s123
      %p125 = scmp.eq.s32.totalorder %s23, 0
      %p126 = por %p124, %p125
      %p127 = scmp.le.s32.totalorder 1, %s17
      %p128 = scmp.lt.s32.totalorder %s17, 3
      %p129 = pnand %p127, %p128
      %p130 = pneg %p129
      // Predicated region
      $region9: #{tpu_custom_call.1} parent=5 // pred_check
        _
      $region10: #{tpu_custom_call.1} parent=5 // pred_check_branch
        %132 = sbr.rel (%p129) target = $region12
      $region11: #{tpu_custom_call.1} parent=5 // pred_region
        %s133 = ssub.s32 %s17, 1
      $region12: #{tpu_custom_call.1} parent=5 // pred_fallthru
        _
      %p134 = scmp.lt.s32.totalorder %s17, 2
      // Predicated region
      $region13: #{tpu_custom_call.1} parent=5 // pred_check
        %p135 = pneg %p134
      $region14: #{tpu_custom_call.1} parent=5 // pred_check_branch
        %137 = sbr.rel (%p135) target = $region16
      $region15: #{tpu_custom_call.1} parent=5 // pred_region
        // Predicated region
        $region17: #{tpu_custom_call.1} parent=15 // pred_check
          %p138 = pneg %p55
        $region18: #{tpu_custom_call.1} parent=15 // pred_check_branch
          %140 = sbr.rel (%p138) target = $region20
        $region19: #{tpu_custom_call.1} parent=15 // pred_region
          %s141 = sand.u32 %s45, 1
          %s142 = scalar_lea.sflag [#allocation4], %s141
          %s143 = sand.u32 %s45, 1
          %s144 = smul.addr %s143, 16
          %s145 = scalar_lea.vmem [#allocation3], %s144
          %s146 = sadd.s32 %s24, %s25
          %p147 = scmp.lt.s32.totalorder %s146, 0
          %s148 = scalar_select %p147, %s146, 0
          %s149 = smul.u32 2, %s148
          %151 = vsyncadd %s142, 0
          %s152 = smul.addr %s149, 8
          %s153 = scalar_lea.hbm %s0, %s152
          %s154 = sshll.u32 %s153, 4
          %s155 = int_to_ptr.hbm [resolvable:$true] %s154
          %s156 = sshll.u32 %s145, 4
          %s157 = int_to_ptr.vmem [resolvable:$true] %s156
          %162 = dma.hbm_to_vmem [thread:$0]  %s155, 256, %s157, %s142, 128, 128, 8
        $region20: #{tpu_custom_call.1} parent=15 // pred_fallthru
          _
        // Predicated region
        $region21: #{tpu_custom_call.1} parent=15 // pred_check
          %p163 = pneg %p87
        $region22: #{tpu_custom_call.1} parent=15 // pred_check_branch
          %165 = sbr.rel (%p163) target = $region24
        $region23: #{tpu_custom_call.1} parent=15 // pred_region
          %s166 = sand.u32 %s77, 1
          %s167 = scalar_lea.sflag [#allocation7], %s166
          %s168 = sand.u32 %s77, 1
          %s169 = smul.addr %s168, 16
          %s170 = scalar_lea.vmem [#allocation6], %s169
          %s171 = sadd.s32 %s24, %s25
          %p172 = scmp.lt.s32.totalorder %s171, 0
          %s173 = scalar_select %p172, %s171, 0
          %s174 = smul.u32 2, %s173
          %176 = vsyncadd %s167, 0
          %s177 = smul.addr %s174, 8
          %s178 = scalar_lea.hbm %s1, %s177
          %s179 = sshll.u32 %s178, 4
          %s180 = int_to_ptr.hbm [resolvable:$true] %s179
          %s181 = sshll.u32 %s170, 4
          %s182 = int_to_ptr.vmem [resolvable:$true] %s181
          %187 = dma.hbm_to_vmem [thread:$0]  %s180, 256, %s182, %s167, 128, 128, 8
        $region24: #{tpu_custom_call.1} parent=15 // pred_fallthru
          _
      $region16: #{tpu_custom_call.1} parent=5 // pred_fallthru
        _
      %p188 = scmp.le.s32.totalorder 1, %s17
      %p189 = scmp.lt.s32.totalorder %s17, 3
      %p190 = pnand %p188, %p189
      %p191 = pneg %p190
      // Predicated region
      $region25: #{tpu_custom_call.1} parent=5 // pred_check
        _
      $region26: #{tpu_custom_call.1} parent=5 // pred_check_branch
        %193 = sbr.rel (%p190) target = $region28
      $region27: #{tpu_custom_call.1} parent=5 // pred_region
        %s194 = ssub.s32 %s17, 1
        %s195 = sand.u32 %s48, 1
        %s196 = scalar_lea.sflag [#allocation4], %s195
        %s197 = sand.u32 %s48, 1
        %s198 = smul.addr %s197, 16
        %s199 = scalar_lea.vmem [#allocation3], %s198
        // Predicated region
        $region29: #{tpu_custom_call.1} parent=27 // pred_check
          %p200 = pneg %p61
        $region30: #{tpu_custom_call.1} parent=27 // pred_check_branch
          %202 = sbr.rel (%p200) target = $region32
        $region31: #{tpu_custom_call.1} parent=27 // pred_region
          %204 = dma.done %s196, 256
        $region32: #{tpu_custom_call.1} parent=27 // pred_fallthru
          _
        %s205 = sand.u32 %s80, 1
        %s206 = scalar_lea.sflag [#allocation7], %s205
        %s207 = sand.u32 %s80, 1
        %s208 = smul.addr %s207, 16
        %s209 = scalar_lea.vmem [#allocation6], %s208
        // Predicated region
        $region33: #{tpu_custom_call.1} parent=27 // pred_check
          %p210 = pneg %p93
        $region34: #{tpu_custom_call.1} parent=27 // pred_check_branch
          %212 = sbr.rel (%p210) target = $region36
        $region35: #{tpu_custom_call.1} parent=27 // pred_region
          %214 = dma.done %s206, 256
        $region36: #{tpu_custom_call.1} parent=27 // pred_fallthru
          _
        %s215 = sand.u32 %s48, 1
        %s216 = scalar_lea.sflag [#allocation4], %s215
        %s217 = sand.u32 %s48, 1
        %s218 = smul.addr %s217, 16
        %s219 = scalar_lea.vmem [#allocation3], %s218
        %p220 = pneg %p61
        %p221 = pneg %p58
        %s222 = sand.u32 %s80, 1
        %s223 = scalar_lea.sflag [#allocation7], %s222
        %s224 = sand.u32 %s80, 1
        %s225 = smul.addr %s224, 16
        %s226 = scalar_lea.vmem [#allocation6], %s225
        %p227 = pneg %p93
        %p228 = pneg %p90
        %p229 = pneg %p119
        %p230 = pneg %p116
        %s231 = sand.u32 %s106, 1
        %s232 = scalar_lea.sflag [#allocation5], %s231
        %s233 = sand.u32 %s106, 1
        %s234 = smul.addr %s233, 8
        %s235 = scalar_lea.vmem [#allocation8], %s234
        %s236 = sadd.s32 %s26, %s27
        %p237 = scmp.lt.s32.totalorder %s236, 0
        %s238 = scalar_select %p237, %s236, 0
        %s239 = smul.u32 2, %s238
        %s240 = sadd.s32 %s26, %s27
        %p241 = scmp.lt.s32.totalorder %s240, 0
        %s242 = scalar_select %p241, %s240, 0
        %s243 = smul.u32 2, %s242
        %p244 = scmp.eq.s32.totalorder %s27, 0
        // Predicated region
        $region37: #{tpu_custom_call.1} parent=27 // pred_check
          %p245 = pneg %p244
        $region38: #{tpu_custom_call.1} parent=27 // pred_check_branch
          %247 = sbr.rel (%p245) target = $region40
        $region39: #{tpu_custom_call.1} parent=27 // pred_region
          %248 = vst [vmem:[#allocation2] sm:$0xff] 0.0
        $region40: #{tpu_custom_call.1} parent=27 // pred_fallthru
          _
        %v249 = vld [vmem:[%s199] sm:$0xff]
        %v250 = vld [vmem:[%s199 + $0x8] sm:$0xff]
        %v251 = vld [vmem:[%s209] sm:$0xff]
        %v252 = vld [vmem:[%s209 + $0x8] sm:$0xff]
        %v253 = vlog2.pop %v249
        %v254 = vmul.f32 %v253, 0.6931472
        %v255 = vlog2.pop %v250
        %v256 = vmul.f32 %v255, 0.6931472
        %v257 = vmax.f32 %v254, -100.0
        %v258 = vmax.f32 %v256, -100.0
        %v259 = vsub.f32 1.0, %v249
        %v260 = vsub.f32 1.0, %v250
        %v261 = vlog2.pop %v259
        %v262 = vmul.f32 %v261, 0.6931472
        %v263 = vlog2.pop %v260
        %v264 = vmul.f32 %v263, 0.6931472
        %v265 = vmax.f32 %v262, -100.0
        %v266 = vmax.f32 %v264, -100.0
        %v267 = vmul.f32 %v251, %v257
        %v268 = vmul.f32 %v252, %v258
        %v269 = vsub.f32 1.0, %v251
        %v270 = vsub.f32 1.0, %v252
        %v271 = vmul.f32 %v269, %v265
        %v272 = vmul.f32 %v270, %v266
        %v273 = vadd.f32 %v267, %v271
        %v274 = vadd.f32 %v268, %v272
        %v275 = vsub.f32 0.0, %v273
        %v276 = vsub.f32 0.0, %v274
        %s277 = sadd.s32 %s26, %s27
        %s278 = smul.u32 %s277, 16
        %v279 = vlaneseq
        %v280 = vshrl.u32 %v279, 7
        %v281 = vadd.s32 %v280, 8
        %v282 = vstv %s278
        %v283 = vadd.s32 %v282, %v280
        %v284 = vadd.s32 %v282, %v281
        %vm285 = vcmp.lt.s32.totalorder %v283, 16
        %vm286 = vcmp.lt.s32.totalorder %v284, 16
        %v287 = vsel %vm285, %v275, 0.0
        %v288 = vsel %vm286, %v276, 0.0
        %v289 = vld [vmem:[#allocation2] sm:$0xff]
        %v290 = vadd.f32 %v287, %v288
        %v291 = vadd.f32 %v289, %v290
        %292 = vst [vmem:[#allocation2] sm:$0xff] %v291
        // Predicated region
        $region41: #{tpu_custom_call.1} parent=27 // pred_check
          %p293 = pneg %p244
        $region42: #{tpu_custom_call.1} parent=27 // pred_check_branch
          %295 = sbr.rel (%p293) target = $region44
        $region43: #{tpu_custom_call.1} parent=27 // pred_region
          %v296 = vld [vmem:[#allocation2] sm:$0xff]
          %297 = vst [vmem:[%s235] sm:$0xff] %v296
        $region44: #{tpu_custom_call.1} parent=27 // pred_fallthru
          _
        %s298 = sand.u32 %s106, 1
        %s299 = scalar_lea.sflag [#allocation5], %s298
        %s300 = sand.u32 %s106, 1
        %s301 = smul.addr %s300, 8
        %s302 = scalar_lea.vmem [#allocation8], %s301
        // Predicated region
        $region45: #{tpu_custom_call.1} parent=27 // pred_check
          %p303 = pneg %p116
        $region46: #{tpu_custom_call.1} parent=27 // pred_check_branch
          %305 = sbr.rel (%p303) target = $region48
        $region47: #{tpu_custom_call.1} parent=27 // pred_region
          %307 = vsyncadd %s299, 0
          %s308 = smul.addr %s26, 8
          %s309 = scalar_lea.hbm %s2, %s308
          %s311 = sshll.u32 %s302, 4
          %s312 = int_to_ptr.vmem [resolvable:$true] %s311
          %s313 = sshll.u32 %s309, 4
          %s314 = int_to_ptr.hbm [resolvable:$true] %s313
          %316 = dma.vmem_to_hbm [thread:$0]  %s312, 128, %s314, %s299
        $region48: #{tpu_custom_call.1} parent=27 // pred_fallthru
          _
      $region28: #{tpu_custom_call.1} parent=5 // pred_fallthru
        _
      %p317 = scmp.le.s32.totalorder 2, %s17
      // Predicated region
      $region49: #{tpu_custom_call.1} parent=5 // pred_check
        %p318 = pneg %p317
      $region50: #{tpu_custom_call.1} parent=5 // pred_check_branch
        %320 = sbr.rel (%p318) target = $region52
      $region51: #{tpu_custom_call.1} parent=5 // pred_region
        %s321 = ssub.s32 %s17, 2
        // Predicated region
        $region53: #{tpu_custom_call.1} parent=51 // pred_check
          %p322 = pneg %p122
        $region54: #{tpu_custom_call.1} parent=51 // pred_check_branch
          %324 = sbr.rel (%p322) target = $region56
        $region55: #{tpu_custom_call.1} parent=51 // pred_region
          %s325 = sand.u32 %s107, 1
          %s326 = scalar_lea.sflag [#allocation5], %s325
          %s327 = sand.u32 %s107, 1
          %s328 = smul.addr %s327, 8
          %s329 = scalar_lea.vmem [#allocation8], %s328
          %331 = dma.done %s326, 128
        $region56: #{tpu_custom_call.1} parent=51 // pred_fallthru
          _
      $region52: #{tpu_custom_call.1} parent=5 // pred_fallthru
        _
    $region6: #{tpu_custom_call.1} parent=1 // loop_footer
      %s21 = sadd.s32 1, %s17
    $region7: #{tpu_custom_call.1} parent=1 // loop_footer_branch
      %16 = sbr.rel target = $region3
    $region8: #{tpu_custom_call.1} parent=1 // loop_exit
      _
    %332 = vsyncpa [#allocation4], 1
    %s333 = scalar_lea.sflag [#allocation4], 1
    %334 = vsyncpa %s333, 1
    %335 = vsyncpa [#allocation7], 1
    %s336 = scalar_lea.sflag [#allocation7], 1
    %337 = vsyncpa %s336, 1
    %338 = vsyncpa [#allocation5], 1
    %s339 = scalar_lea.sflag [#allocation5], 1
    %340 = vsyncpa %s339, 1

</llo_original>
